<compile_context>
chip_gen: v5e
topology: v5e:2x2
jax: 0.10.0
libtpu: 0.0.40
codegen_flags: <defaults>
</compile_context>

<pallas_src>
import math

import jax
import jax.numpy as jnp
from jax import lax
from jax.experimental import pallas as pl
from jax.experimental.pallas import tpu as pltpu

INPUT_SIZE = 1
LAYER_SIZE = 2          # number of qubits
ZZ_REPS = 2             # qiskit ZZFeatureMap default reps
PI = math.pi

_SUB = 8                # sublane tile (f32)
_LANE = 128             # lane width of the packed slab (one vreg wide)
_TILE = _SUB * _LANE    # 1024 samples per (8, 128) base tile
_MAX_CHUNKS = 32        # max base tiles per grid step -> (256, 128) = 128 KiB blocks
_MIN_GRID = 8           # target >= this many grid steps when the batch allows

# float32 Cody-Waite split of pi/2 for the shared sincos range reduction.
_TWO_OVER_PI = 0.6366197723675814
_PIO2_HI = 1.5707963705062866        # float32(pi/2)
_PIO2_LO = -4.371139000186243e-08    # pi/2 - float32(pi/2)


def _sincos(x):
    """(sin x, cos x) with one shared range reduction and short polynomials.

    On TPU jnp.sin/jnp.cos lower to long VALU sequences (not EUP); sharing the
    Cody-Waite reduction across each pair and using low-degree polynomials
    (abs error ~1e-6, far below the 2e-3 tolerance) cuts the binding VALU slot.
    """
    k = jnp.floor(x * _TWO_OVER_PI + 0.5)
    r = x - k * _PIO2_HI
    r = r - k * _PIO2_LO
    r2 = r * r
    sin_r = r * (1.0 + r2 * (-1.6666654e-1 + r2 * (8.3321608e-3 + r2 * (-1.9515296e-4))))
    cos_r = 1.0 + r2 * (-0.5 + r2 * (4.1666645e-2 + r2 * (-1.3887316e-3 + r2 * 2.4433157e-5)))
    q = k - 4.0 * jnp.floor(0.25 * k)          # quadrant in {0, 1, 2, 3}
    swap = (q == 1.0) | (q == 3.0)
    s = jnp.where(swap, cos_r, sin_r)
    c = jnp.where(swap, sin_r, cos_r)
    s = jnp.where(q >= 2.0, -s, s)
    c = jnp.where((q == 1.0) | (q == 2.0), -c, c)
    return s, c


def _make_kernel(num_chunks):
    """Kernel over a (num_chunks*8, 128) block, strip-mined in (8, 128) tiles."""

    def kernel(params_ref, x_ref, out_ref):
        # params (SMEM, f32[14]):
        #   [w0, w1, b0, b1,
        #    m00, m11, m22, m33, 2*m01, 2*m02, 2*m03, 2*m12, 2*m13, 2*m23]
        w0 = params_ref[0]
        w1 = params_ref[1]
        b0 = params_ref[2]
        b1 = params_ref[3]
        m00 = params_ref[4]
        m11 = params_ref[5]
        m22 = params_ref[6]
        m33 = params_ref[7]
        m01 = params_ref[8]
        m02 = params_ref[9]
        m03 = params_ref[10]
        m12 = params_ref[11]
        m13 = params_ref[12]
        m23 = params_ref[13]

        def chunk(j, carry):
            rows = pl.ds(pl.multiple_of(j * _SUB, _SUB), _SUB)
            x = x_ref[rows, :]                          # (8, 128): one vreg

            # ---- classical head: nn.Linear(1, 2) + ReLU ---------------------
            x0 = jnp.maximum(w0 * x + b0, 0.0)
            x1 = jnp.maximum(w1 * x + b1, 0.0)

            # ---- base phase rotors (3 shared-reduction sincos) --------------
            s0, c0 = _sincos(2.0 * x0)
            s1, c1 = _sincos(2.0 * x1)
            sp, cp = _sincos(2.0 * (PI - x0) * (PI - x1))   # ZZ entangler phase

            # composite rotors via angle addition (pure VALU):
            #   idx3 <- 2*x0 + 2*x1, idx1 <- 2*x0 + phi, idx2 <- 2*x1 + phi
            c01 = c0 * c1 - s0 * s1
            s01 = s0 * c1 + c0 * s1
            cA = c0 * cp - s0 * sp
            sA = s0 * cp + c0 * sp
            cB = c1 * cp - s1 * sp
            sB = s1 * cp + c1 * sp

            # ---- ZZFeatureMap rep 1 (peeled, 0.5 dropped) -------------------
            #   unnormalized amps: (1, cA+i*sA, cB+i*sB, c01+i*s01)
            # ---- rep 2 Hadamard (+-1 matrix, 0.5 dropped), amp0 = 1+0i ------
            rsa = 1.0 + cA
            rda = 1.0 - cA
            rsb = cB + c01
            rdb = cB - c01
            rh0 = rsa + rsb
            rh1 = rda + rdb
            rh2 = rsa - rsb
            rh3 = rda - rdb
            isb = sB + s01
            idb = sB - s01
            ih0 = sA + isb
            ih1 = idb - sA
            ih2 = sA - isb
            ih3 = -sA - idb

            # ---- rep 2 phase layer ------------------------------------------
            re0 = rh0
            im0 = ih0
            re1 = rh1 * cA - ih1 * sA
            im1 = rh1 * sA + ih1 * cA
            re2 = rh2 * cB - ih2 * sB
            im2 = rh2 * sB + ih2 * cB
            re3 = rh3 * c01 - ih3 * s01
            im3 = rh3 * s01 + ih3 * c01

            # ---- RealAmplitudes + <Z⊗Z> as a precomputed quadratic form -----
            #   E = re^T M re + im^T M im, M = U^T (Z⊗Z) U / 16 (SMEM scalars,
            #   off-diagonals pre-doubled, 1/16 absorbs the dropped 0.5's)
            e = m00 * (re0 * re0 + im0 * im0)
            e += m11 * (re1 * re1 + im1 * im1)
            e += m22 * (re2 * re2 + im2 * im2)
            e += m33 * (re3 * re3 + im3 * im3)
            e += m01 * (re0 * re1 + im0 * im1)
            e += m02 * (re0 * re2 + im0 * im2)
            e += m03 * (re0 * re3 + im0 * im3)
            e += m12 * (re1 * re2 + im1 * im2)
            e += m13 * (re1 * re3 + im1 * im3)
            e += m23 * (re2 * re3 + im2 * im3)

            out_ref[rows, :] = e
            return carry

        lax.fori_loop(0, num_chunks, chunk, 0, unroll=min(2, num_chunks))

    return kernel


def hybrid_qnn_forward(x, w, b, theta):
    """x: (B, 1) f32 -> (B, 1) f32 expectation values, like HybridQNN.forward."""
    B = x.shape[0]

    # ---- tiling: (8,128) base tiles, several per grid step, >= 2 steps when
    # the batch allows (keeps both v7x TensorCores busy and pipelining alive).
    units = int(pl.cdiv(B, _TILE))                       # base tiles needed
    chunks = max(1, min(_MAX_CHUNKS, int(pl.cdiv(units, _MIN_GRID))))
    grid_len = int(pl.cdiv(units, chunks))
    padded = grid_len * chunks * _TILE
    rows = padded // _LANE                               # multiple of 8
    block_rows = chunks * _SUB

    # ---- RealAmplitudes(2, reps=1) + Z⊗Z folded into one real symmetric 4x4,
    # computed once in XLA (sample independent): M = U^T (Z⊗Z) U / 16.
    def ry(t):
        c = jnp.cos(0.5 * t)
        s = jnp.sin(0.5 * t)
        return jnp.array([[c, -s], [s, c]], jnp.float32)

    eye2 = jnp.eye(2, dtype=jnp.float32)
    cx = jnp.eye(4, dtype=jnp.float32)[jnp.array([0, 3, 2, 1])]   # CX(0,1), little-endian
    u = (jnp.kron(ry(theta[3]), eye2) @ jnp.kron(eye2, ry(theta[2]))
         @ cx @ jnp.kron(ry(theta[1]), eye2) @ jnp.kron(eye2, ry(theta[0])))
    zz = jnp.diag(jnp.array([1.0, -1.0, -1.0, 1.0], jnp.float32))
    m = (u.T @ zz @ u) * (1.0 / 16.0)

    params = jnp.concatenate([
        w.reshape(-1).astype(jnp.float32),
        b.reshape(-1).astype(jnp.float32),
        jnp.stack([m[0, 0], m[1, 1], m[2, 2], m[3, 3]]),
        2.0 * jnp.stack([m[0, 1], m[0, 2], m[0, 3], m[1, 2], m[1, 3], m[2, 3]]),
    ]).astype(jnp.float32)                               # f32[14]

    # pack the batch onto (sublane, lane): (rows, 128), lane-dense blocks.
    x_flat = x.reshape(-1).astype(jnp.float32)
    x_slab = jnp.pad(x_flat, (0, padded - B)).reshape(rows, _LANE)

    out_slab = pl.pallas_call(
        _make_kernel(chunks),
        out_shape=jax.ShapeDtypeStruct((rows, _LANE), jnp.float32),
        grid=(grid_len,),
        in_specs=[
            pl.BlockSpec(memory_space=pltpu.MemorySpace.SMEM),        # params
            pl.BlockSpec((block_rows, _LANE), lambda i: (i, 0)),      # x slab
        ],
        out_specs=pl.BlockSpec((block_rows, _LANE), lambda i: (i, 0)),
        compiler_params=pltpu.CompilerParams(
            dimension_semantics=("parallel",),   # shards the grid over v7x's 2 TCs
        ),
        cost_estimate=pl.CostEstimate(
            flops=320 * padded,
            transcendentals=0,
            bytes_accessed=8 * padded + 14 * 4,
        ),
    )(params, x_slab)

    return out_slab.reshape(-1)[:B].reshape(B, 1)


def _reference_forward(x, w, b, theta):
    """Pure-JAX reference (same math, statevector with complex dtype)."""
    y = jnp.maximum(x @ w.T + b, 0.0)                 # (B, 2)
    x0, x1 = y[:, 0], y[:, 1]
    B = x.shape[0]
    state = jnp.zeros((B, 4), jnp.complex64).at[:, 0].set(1.0)
    H = 0.5 * jnp.array(
        [[1, 1, 1, 1], [1, -1, 1, -1], [1, 1, -1, -1], [1, -1, -1, 1]],
        jnp.complex64,
    )
    swap13 = jnp.array([0, 3, 2, 1])
    for _ in range(ZZ_REPS):
        state = state @ H.T
        ph = jnp.stack(
            [jnp.zeros_like(x0), 2 * x0, 2 * x1, 2 * (x0 + x1)], axis=1
        )
        state = state * jnp.exp(1j * ph)
        state = state[:, swap13]
        phi = 2.0 * (PI - x0) * (PI - x1)
        ph2 = jnp.stack([jnp.zeros_like(phi), jnp.zeros_like(phi), phi, phi], axis=1)
        state = state * jnp.exp(1j * ph2)
        state = state[:, swap13]

    def ry_mat(t, qubit):
        c, s = jnp.cos(t / 2), jnp.sin(t / 2)
        r = jnp.array([[c, -s], [s, c]], jnp.complex64)
        eye = jnp.eye(2, dtype=jnp.complex64)
        return jnp.kron(eye, r) if qubit == 0 else jnp.kron(r, eye)

    state = state @ ry_mat(theta[0], 0).T
    state = state @ ry_mat(theta[1], 1).T
    state = state[:, swap13]
    state = state @ ry_mat(theta[2], 0).T
    state = state @ ry_mat(theta[3], 1).T
    probs = jnp.abs(state) ** 2
    zz = jnp.array([1.0, -1.0, -1.0, 1.0])
    return (probs * zz).sum(axis=1, keepdims=True)


if __name__ == "__main__":
    key = jax.random.PRNGKey(0)
    k_x, k_w, k_b, k_t = jax.random.split(key, 4)

    B = 8
    x = jax.random.normal(k_x, (B, INPUT_SIZE), jnp.float32)          # (8, 1)
    w = jax.random.normal(k_w, (LAYER_SIZE, INPUT_SIZE), jnp.float32) * 0.5
    b = jax.random.normal(k_b, (LAYER_SIZE,), jnp.float32) * 0.1
    theta = jax.random.uniform(k_t, (4,), jnp.float32, 0.0, 2.0 * PI)

    out = jax.block_until_ready(hybrid_qnn_forward(x, w, b, theta))

    ref = _reference_forward(x, w, b, theta)
    assert out.shape == (B, 1)
    assert jnp.allclose(out, ref, atol=2e-3), (out, ref)

    print("KERNEL_OK")
</pallas_src>

<mosaic_0001>
module attributes {stable_mosaic.version = 11 : i64} {
  func.func @kernel(%arg0: i32, %arg1: memref<14xf32, #tpu.memory_space<smem>>, %arg2: memref<8x128xf32, #tpu.memory_space<vmem>>, %arg3: memref<8x128xf32, #tpu.memory_space<vmem>>) attributes {dimension_semantics = [#tpu.dimension_semantics<parallel>], iteration_bounds = array<i64: 1>, scalar_prefetch = 0 : i64, scratch_operands = 0 : i64, tpu.core_type = #tpu.core_type<tc>, window_params = [{transform_indices = @transform_0, window_bounds = array<i64: 14>}, {transform_indices = @transform_1, window_bounds = array<i64: 8, 128>}, {transform_indices = @transform_2, window_bounds = array<i64: 8, 128>}]} {
    %c0 = arith.constant 0 : index
    %0 = memref.load %arg1[%c0] : memref<14xf32, #tpu.memory_space<smem>>
    %c1 = arith.constant 1 : index
    %1 = memref.load %arg1[%c1] : memref<14xf32, #tpu.memory_space<smem>>
    %c2 = arith.constant 2 : index
    %2 = memref.load %arg1[%c2] : memref<14xf32, #tpu.memory_space<smem>>
    %c3 = arith.constant 3 : index
    %3 = memref.load %arg1[%c3] : memref<14xf32, #tpu.memory_space<smem>>
    %c4 = arith.constant 4 : index
    %4 = memref.load %arg1[%c4] : memref<14xf32, #tpu.memory_space<smem>>
    %c5 = arith.constant 5 : index
    %5 = memref.load %arg1[%c5] : memref<14xf32, #tpu.memory_space<smem>>
    %c6 = arith.constant 6 : index
    %6 = memref.load %arg1[%c6] : memref<14xf32, #tpu.memory_space<smem>>
    %c7 = arith.constant 7 : index
    %7 = memref.load %arg1[%c7] : memref<14xf32, #tpu.memory_space<smem>>
    %c8 = arith.constant 8 : index
    %8 = memref.load %arg1[%c8] : memref<14xf32, #tpu.memory_space<smem>>
    %c9 = arith.constant 9 : index
    %9 = memref.load %arg1[%c9] : memref<14xf32, #tpu.memory_space<smem>>
    %c10 = arith.constant 10 : index
    %10 = memref.load %arg1[%c10] : memref<14xf32, #tpu.memory_space<smem>>
    %c11 = arith.constant 11 : index
    %11 = memref.load %arg1[%c11] : memref<14xf32, #tpu.memory_space<smem>>
    %c12 = arith.constant 12 : index
    %12 = memref.load %arg1[%c12] : memref<14xf32, #tpu.memory_space<smem>>
    %c13 = arith.constant 13 : index
    %13 = memref.load %arg1[%c13] : memref<14xf32, #tpu.memory_space<smem>>
    %c0_i32 = arith.constant 0 : i32
    %c8_i32 = arith.constant 8 : i32
    %14 = arith.muli %c0_i32, %c8_i32 : i32
    %15 = tpu.assume_multiple %14, 8 : i32
    %16 = arith.index_cast %15 : i32 to index
    %c0_0 = arith.constant 0 : index
    %17 = vector.load %arg2[%16, %c0_0] : memref<8x128xf32, #tpu.memory_space<vmem>>, vector<8x128xf32>
    %18 = vector.broadcast %0 : f32 to vector<8x128xf32>
    %19 = arith.mulf %18, %17 : vector<8x128xf32>
    %20 = vector.broadcast %2 : f32 to vector<8x128xf32>
    %21 = arith.addf %19, %20 : vector<8x128xf32>
    %cst = arith.constant 0.000000e+00 : f32
    %22 = vector.broadcast %cst : f32 to vector<8x128xf32>
    %23 = arith.maximumf %21, %22 : vector<8x128xf32>
    %24 = vector.broadcast %1 : f32 to vector<8x128xf32>
    %25 = arith.mulf %24, %17 : vector<8x128xf32>
    %26 = vector.broadcast %3 : f32 to vector<8x128xf32>
    %27 = arith.addf %25, %26 : vector<8x128xf32>
    %cst_1 = arith.constant 0.000000e+00 : f32
    %28 = vector.broadcast %cst_1 : f32 to vector<8x128xf32>
    %29 = arith.maximumf %27, %28 : vector<8x128xf32>
    %cst_2 = arith.constant 2.000000e+00 : f32
    %30 = vector.broadcast %cst_2 : f32 to vector<8x128xf32>
    %31 = arith.mulf %30, %23 : vector<8x128xf32>
    %cst_3 = arith.constant 0.636619746 : f32
    %32 = vector.broadcast %cst_3 : f32 to vector<8x128xf32>
    %33 = arith.mulf %31, %32 : vector<8x128xf32>
    %cst_4 = arith.constant 5.000000e-01 : f32
    %34 = vector.broadcast %cst_4 : f32 to vector<8x128xf32>
    %35 = arith.addf %33, %34 : vector<8x128xf32>
    %36 = math.floor %35 : vector<8x128xf32>
    %cst_5 = arith.constant 1.57079637 : f32
    %37 = vector.broadcast %cst_5 : f32 to vector<8x128xf32>
    %38 = arith.mulf %36, %37 : vector<8x128xf32>
    %39 = arith.subf %31, %38 : vector<8x128xf32>
    %cst_6 = arith.constant -4.37113883E-8 : f32
    %40 = vector.broadcast %cst_6 : f32 to vector<8x128xf32>
    %41 = arith.mulf %36, %40 : vector<8x128xf32>
    %42 = arith.subf %39, %41 : vector<8x128xf32>
    %43 = arith.mulf %42, %42 : vector<8x128xf32>
    %cst_7 = arith.constant -1.95152956E-4 : f32
    %44 = vector.broadcast %cst_7 : f32 to vector<8x128xf32>
    %45 = arith.mulf %43, %44 : vector<8x128xf32>
    %cst_8 = arith.constant 0.00833216123 : f32
    %46 = vector.broadcast %cst_8 : f32 to vector<8x128xf32>
    %47 = arith.addf %46, %45 : vector<8x128xf32>
    %48 = arith.mulf %43, %47 : vector<8x128xf32>
    %cst_9 = arith.constant -0.166666538 : f32
    %49 = vector.broadcast %cst_9 : f32 to vector<8x128xf32>
    %50 = arith.addf %49, %48 : vector<8x128xf32>
    %51 = arith.mulf %43, %50 : vector<8x128xf32>
    %cst_10 = arith.constant 1.000000e+00 : f32
    %52 = vector.broadcast %cst_10 : f32 to vector<8x128xf32>
    %53 = arith.addf %52, %51 : vector<8x128xf32>
    %54 = arith.mulf %42, %53 : vector<8x128xf32>
    %cst_11 = arith.constant 2.44331568E-5 : f32
    %55 = vector.broadcast %cst_11 : f32 to vector<8x128xf32>
    %56 = arith.mulf %43, %55 : vector<8x128xf32>
    %cst_12 = arith.constant -0.00138873165 : f32
    %57 = vector.broadcast %cst_12 : f32 to vector<8x128xf32>
    %58 = arith.addf %57, %56 : vector<8x128xf32>
    %59 = arith.mulf %43, %58 : vector<8x128xf32>
    %cst_13 = arith.constant 0.0416666456 : f32
    %60 = vector.broadcast %cst_13 : f32 to vector<8x128xf32>
    %61 = arith.addf %60, %59 : vector<8x128xf32>
    %62 = arith.mulf %43, %61 : vector<8x128xf32>
    %cst_14 = arith.constant -5.000000e-01 : f32
    %63 = vector.broadcast %cst_14 : f32 to vector<8x128xf32>
    %64 = arith.addf %63, %62 : vector<8x128xf32>
    %65 = arith.mulf %43, %64 : vector<8x128xf32>
    %cst_15 = arith.constant 1.000000e+00 : f32
    %66 = vector.broadcast %cst_15 : f32 to vector<8x128xf32>
    %67 = arith.addf %66, %65 : vector<8x128xf32>
    %cst_16 = arith.constant 2.500000e-01 : f32
    %68 = vector.broadcast %cst_16 : f32 to vector<8x128xf32>
    %69 = arith.mulf %68, %36 : vector<8x128xf32>
    %70 = math.floor %69 : vector<8x128xf32>
    %cst_17 = arith.constant 4.000000e+00 : f32
    %71 = vector.broadcast %cst_17 : f32 to vector<8x128xf32>
    %72 = arith.mulf %71, %70 : vector<8x128xf32>
    %73 = arith.subf %36, %72 : vector<8x128xf32>
    %cst_18 = arith.constant 1.000000e+00 : f32
    %74 = vector.broadcast %cst_18 : f32 to vector<8x128xf32>
    %75 = arith.cmpf oeq, %73, %74 : vector<8x128xf32>
    %cst_19 = arith.constant 3.000000e+00 : f32
    %76 = vector.broadcast %cst_19 : f32 to vector<8x128xf32>
    %77 = arith.cmpf oeq, %73, %76 : vector<8x128xf32>
    %78 = arith.ori %75, %77 : vector<8x128xi1>
    %79 = arith.select %78, %67, %54 : vector<8x128xi1>, vector<8x128xf32>
    %80 = arith.select %78, %54, %67 : vector<8x128xi1>, vector<8x128xf32>
    %cst_20 = arith.constant 2.000000e+00 : f32
    %81 = vector.broadcast %cst_20 : f32 to vector<8x128xf32>
    %82 = arith.cmpf oge, %73, %81 : vector<8x128xf32>
    %cst_21 = arith.constant 0.000000e+00 : f32
    %83 = vector.broadcast %cst_21 : f32 to vector<8x128xf32>
    %84 = arith.subf %83, %79 : vector<8x128xf32>
    %85 = arith.select %82, %84, %79 : vector<8x128xi1>, vector<8x128xf32>
    %cst_22 = arith.constant 1.000000e+00 : f32
    %86 = vector.broadcast %cst_22 : f32 to vector<8x128xf32>
    %87 = arith.cmpf oeq, %73, %86 : vector<8x128xf32>
    %cst_23 = arith.constant 2.000000e+00 : f32
    %88 = vector.broadcast %cst_23 : f32 to vector<8x128xf32>
    %89 = arith.cmpf oeq, %73, %88 : vector<8x128xf32>
    %90 = arith.ori %87, %89 : vector<8x128xi1>
    %cst_24 = arith.constant 0.000000e+00 : f32
    %91 = vector.broadcast %cst_24 : f32 to vector<8x128xf32>
    %92 = arith.subf %91, %80 : vector<8x128xf32>
    %93 = arith.select %90, %92, %80 : vector<8x128xi1>, vector<8x128xf32>
    %cst_25 = arith.constant 2.000000e+00 : f32
    %94 = vector.broadcast %cst_25 : f32 to vector<8x128xf32>
    %95 = arith.mulf %94, %29 : vector<8x128xf32>
    %cst_26 = arith.constant 0.636619746 : f32
    %96 = vector.broadcast %cst_26 : f32 to vector<8x128xf32>
    %97 = arith.mulf %95, %96 : vector<8x128xf32>
    %cst_27 = arith.constant 5.000000e-01 : f32
    %98 = vector.broadcast %cst_27 : f32 to vector<8x128xf32>
    %99 = arith.addf %97, %98 : vector<8x128xf32>
    %100 = math.floor %99 : vector<8x128xf32>
    %cst_28 = arith.constant 1.57079637 : f32
    %101 = vector.broadcast %cst_28 : f32 to vector<8x128xf32>
    %102 = arith.mulf %100, %101 : vector<8x128xf32>
    %103 = arith.subf %95, %102 : vector<8x128xf32>
    %cst_29 = arith.constant -4.37113883E-8 : f32
    %104 = vector.broadcast %cst_29 : f32 to vector<8x128xf32>
    %105 = arith.mulf %100, %104 : vector<8x128xf32>
    %106 = arith.subf %103, %105 : vector<8x128xf32>
    %107 = arith.mulf %106, %106 : vector<8x128xf32>
    %cst_30 = arith.constant -1.95152956E-4 : f32
    %108 = vector.broadcast %cst_30 : f32 to vector<8x128xf32>
    %109 = arith.mulf %107, %108 : vector<8x128xf32>
    %cst_31 = arith.constant 0.00833216123 : f32
    %110 = vector.broadcast %cst_31 : f32 to vector<8x128xf32>
    %111 = arith.addf %110, %109 : vector<8x128xf32>
    %112 = arith.mulf %107, %111 : vector<8x128xf32>
    %cst_32 = arith.constant -0.166666538 : f32
    %113 = vector.broadcast %cst_32 : f32 to vector<8x128xf32>
    %114 = arith.addf %113, %112 : vector<8x128xf32>
    %115 = arith.mulf %107, %114 : vector<8x128xf32>
    %cst_33 = arith.constant 1.000000e+00 : f32
    %116 = vector.broadcast %cst_33 : f32 to vector<8x128xf32>
    %117 = arith.addf %116, %115 : vector<8x128xf32>
    %118 = arith.mulf %106, %117 : vector<8x128xf32>
    %cst_34 = arith.constant 2.44331568E-5 : f32
    %119 = vector.broadcast %cst_34 : f32 to vector<8x128xf32>
    %120 = arith.mulf %107, %119 : vector<8x128xf32>
    %cst_35 = arith.constant -0.00138873165 : f32
    %121 = vector.broadcast %cst_35 : f32 to vector<8x128xf32>
    %122 = arith.addf %121, %120 : vector<8x128xf32>
    %123 = arith.mulf %107, %122 : vector<8x128xf32>
    %cst_36 = arith.constant 0.0416666456 : f32
    %124 = vector.broadcast %cst_36 : f32 to vector<8x128xf32>
    %125 = arith.addf %124, %123 : vector<8x128xf32>
    %126 = arith.mulf %107, %125 : vector<8x128xf32>
    %cst_37 = arith.constant -5.000000e-01 : f32
    %127 = vector.broadcast %cst_37 : f32 to vector<8x128xf32>
    %128 = arith.addf %127, %126 : vector<8x128xf32>
    %129 = arith.mulf %107, %128 : vector<8x128xf32>
    %cst_38 = arith.constant 1.000000e+00 : f32
    %130 = vector.broadcast %cst_38 : f32 to vector<8x128xf32>
    %131 = arith.addf %130, %129 : vector<8x128xf32>
    %cst_39 = arith.constant 2.500000e-01 : f32
    %132 = vector.broadcast %cst_39 : f32 to vector<8x128xf32>
    %133 = arith.mulf %132, %100 : vector<8x128xf32>
    %134 = math.floor %133 : vector<8x128xf32>
    %cst_40 = arith.constant 4.000000e+00 : f32
    %135 = vector.broadcast %cst_40 : f32 to vector<8x128xf32>
    %136 = arith.mulf %135, %134 : vector<8x128xf32>
    %137 = arith.subf %100, %136 : vector<8x128xf32>
    %cst_41 = arith.constant 1.000000e+00 : f32
    %138 = vector.broadcast %cst_41 : f32 to vector<8x128xf32>
    %139 = arith.cmpf oeq, %137, %138 : vector<8x128xf32>
    %cst_42 = arith.constant 3.000000e+00 : f32
    %140 = vector.broadcast %cst_42 : f32 to vector<8x128xf32>
    %141 = arith.cmpf oeq, %137, %140 : vector<8x128xf32>
    %142 = arith.ori %139, %141 : vector<8x128xi1>
    %143 = arith.select %142, %131, %118 : vector<8x128xi1>, vector<8x128xf32>
    %144 = arith.select %142, %118, %131 : vector<8x128xi1>, vector<8x128xf32>
    %cst_43 = arith.constant 2.000000e+00 : f32
    %145 = vector.broadcast %cst_43 : f32 to vector<8x128xf32>
    %146 = arith.cmpf oge, %137, %145 : vector<8x128xf32>
    %cst_44 = arith.constant 0.000000e+00 : f32
    %147 = vector.broadcast %cst_44 : f32 to vector<8x128xf32>
    %148 = arith.subf %147, %143 : vector<8x128xf32>
    %149 = arith.select %146, %148, %143 : vector<8x128xi1>, vector<8x128xf32>
    %cst_45 = arith.constant 1.000000e+00 : f32
    %150 = vector.broadcast %cst_45 : f32 to vector<8x128xf32>
    %151 = arith.cmpf oeq, %137, %150 : vector<8x128xf32>
    %cst_46 = arith.constant 2.000000e+00 : f32
    %152 = vector.broadcast %cst_46 : f32 to vector<8x128xf32>
    %153 = arith.cmpf oeq, %137, %152 : vector<8x128xf32>
    %154 = arith.ori %151, %153 : vector<8x128xi1>
    %cst_47 = arith.constant 0.000000e+00 : f32
    %155 = vector.broadcast %cst_47 : f32 to vector<8x128xf32>
    %156 = arith.subf %155, %144 : vector<8x128xf32>
    %157 = arith.select %154, %156, %144 : vector<8x128xi1>, vector<8x128xf32>
    %cst_48 = arith.constant 3.14159274 : f32
    %158 = vector.broadcast %cst_48 : f32 to vector<8x128xf32>
    %159 = arith.subf %158, %23 : vector<8x128xf32>
    %cst_49 = arith.constant 2.000000e+00 : f32
    %160 = vector.broadcast %cst_49 : f32 to vector<8x128xf32>
    %161 = arith.mulf %160, %159 : vector<8x128xf32>
    %cst_50 = arith.constant 3.14159274 : f32
    %162 = vector.broadcast %cst_50 : f32 to vector<8x128xf32>
    %163 = arith.subf %162, %29 : vector<8x128xf32>
    %164 = arith.mulf %161, %163 : vector<8x128xf32>
    %cst_51 = arith.constant 0.636619746 : f32
    %165 = vector.broadcast %cst_51 : f32 to vector<8x128xf32>
    %166 = arith.mulf %164, %165 : vector<8x128xf32>
    %cst_52 = arith.constant 5.000000e-01 : f32
    %167 = vector.broadcast %cst_52 : f32 to vector<8x128xf32>
    %168 = arith.addf %166, %167 : vector<8x128xf32>
    %169 = math.floor %168 : vector<8x128xf32>
    %cst_53 = arith.constant 1.57079637 : f32
    %170 = vector.broadcast %cst_53 : f32 to vector<8x128xf32>
    %171 = arith.mulf %169, %170 : vector<8x128xf32>
    %172 = arith.subf %164, %171 : vector<8x128xf32>
    %cst_54 = arith.constant -4.37113883E-8 : f32
    %173 = vector.broadcast %cst_54 : f32 to vector<8x128xf32>
    %174 = arith.mulf %169, %173 : vector<8x128xf32>
    %175 = arith.subf %172, %174 : vector<8x128xf32>
    %176 = arith.mulf %175, %175 : vector<8x128xf32>
    %cst_55 = arith.constant -1.95152956E-4 : f32
    %177 = vector.broadcast %cst_55 : f32 to vector<8x128xf32>
    %178 = arith.mulf %176, %177 : vector<8x128xf32>
    %cst_56 = arith.constant 0.00833216123 : f32
    %179 = vector.broadcast %cst_56 : f32 to vector<8x128xf32>
    %180 = arith.addf %179, %178 : vector<8x128xf32>
    %181 = arith.mulf %176, %180 : vector<8x128xf32>
    %cst_57 = arith.constant -0.166666538 : f32
    %182 = vector.broadcast %cst_57 : f32 to vector<8x128xf32>
    %183 = arith.addf %182, %181 : vector<8x128xf32>
    %184 = arith.mulf %176, %183 : vector<8x128xf32>
    %cst_58 = arith.constant 1.000000e+00 : f32
    %185 = vector.broadcast %cst_58 : f32 to vector<8x128xf32>
    %186 = arith.addf %185, %184 : vector<8x128xf32>
    %187 = arith.mulf %175, %186 : vector<8x128xf32>
    %cst_59 = arith.constant 2.44331568E-5 : f32
    %188 = vector.broadcast %cst_59 : f32 to vector<8x128xf32>
    %189 = arith.mulf %176, %188 : vector<8x128xf32>
    %cst_60 = arith.constant -0.00138873165 : f32
    %190 = vector.broadcast %cst_60 : f32 to vector<8x128xf32>
    %191 = arith.addf %190, %189 : vector<8x128xf32>
    %192 = arith.mulf %176, %191 : vector<8x128xf32>
    %cst_61 = arith.constant 0.0416666456 : f32
    %193 = vector.broadcast %cst_61 : f32 to vector<8x128xf32>
    %194 = arith.addf %193, %192 : vector<8x128xf32>
    %195 = arith.mulf %176, %194 : vector<8x128xf32>
    %cst_62 = arith.constant -5.000000e-01 : f32
    %196 = vector.broadcast %cst_62 : f32 to vector<8x128xf32>
    %197 = arith.addf %196, %195 : vector<8x128xf32>
    %198 = arith.mulf %176, %197 : vector<8x128xf32>
    %cst_63 = arith.constant 1.000000e+00 : f32
    %199 = vector.broadcast %cst_63 : f32 to vector<8x128xf32>
    %200 = arith.addf %199, %198 : vector<8x128xf32>
    %cst_64 = arith.constant 2.500000e-01 : f32
    %201 = vector.broadcast %cst_64 : f32 to vector<8x128xf32>
    %202 = arith.mulf %201, %169 : vector<8x128xf32>
    %203 = math.floor %202 : vector<8x128xf32>
    %cst_65 = arith.constant 4.000000e+00 : f32
    %204 = vector.broadcast %cst_65 : f32 to vector<8x128xf32>
    %205 = arith.mulf %204, %203 : vector<8x128xf32>
    %206 = arith.subf %169, %205 : vector<8x128xf32>
    %cst_66 = arith.constant 1.000000e+00 : f32
    %207 = vector.broadcast %cst_66 : f32 to vector<8x128xf32>
    %208 = arith.cmpf oeq, %206, %207 : vector<8x128xf32>
    %cst_67 = arith.constant 3.000000e+00 : f32
    %209 = vector.broadcast %cst_67 : f32 to vector<8x128xf32>
    %210 = arith.cmpf oeq, %206, %209 : vector<8x128xf32>
    %211 = arith.ori %208, %210 : vector<8x128xi1>
    %212 = arith.select %211, %200, %187 : vector<8x128xi1>, vector<8x128xf32>
    %213 = arith.select %211, %187, %200 : vector<8x128xi1>, vector<8x128xf32>
    %cst_68 = arith.constant 2.000000e+00 : f32
    %214 = vector.broadcast %cst_68 : f32 to vector<8x128xf32>
    %215 = arith.cmpf oge, %206, %214 : vector<8x128xf32>
    %cst_69 = arith.constant 0.000000e+00 : f32
    %216 = vector.broadcast %cst_69 : f32 to vector<8x128xf32>
    %217 = arith.subf %216, %212 : vector<8x128xf32>
    %218 = arith.select %215, %217, %212 : vector<8x128xi1>, vector<8x128xf32>
    %cst_70 = arith.constant 1.000000e+00 : f32
    %219 = vector.broadcast %cst_70 : f32 to vector<8x128xf32>
    %220 = arith.cmpf oeq, %206, %219 : vector<8x128xf32>
    %cst_71 = arith.constant 2.000000e+00 : f32
    %221 = vector.broadcast %cst_71 : f32 to vector<8x128xf32>
    %222 = arith.cmpf oeq, %206, %221 : vector<8x128xf32>
    %223 = arith.ori %220, %222 : vector<8x128xi1>
    %cst_72 = arith.constant 0.000000e+00 : f32
    %224 = vector.broadcast %cst_72 : f32 to vector<8x128xf32>
    %225 = arith.subf %224, %213 : vector<8x128xf32>
    %226 = arith.select %223, %225, %213 : vector<8x128xi1>, vector<8x128xf32>
    %227 = arith.mulf %93, %157 : vector<8x128xf32>
    %228 = arith.mulf %85, %149 : vector<8x128xf32>
    %229 = arith.subf %227, %228 : vector<8x128xf32>
    %230 = arith.mulf %85, %157 : vector<8x128xf32>
    %231 = arith.mulf %93, %149 : vector<8x128xf32>
    %232 = arith.addf %230, %231 : vector<8x128xf32>
    %233 = arith.mulf %93, %226 : vector<8x128xf32>
    %234 = arith.mulf %85, %218 : vector<8x128xf32>
    %235 = arith.subf %233, %234 : vector<8x128xf32>
    %236 = arith.mulf %85, %226 : vector<8x128xf32>
    %237 = arith.mulf %93, %218 : vector<8x128xf32>
    %238 = arith.addf %236, %237 : vector<8x128xf32>
    %239 = arith.mulf %157, %226 : vector<8x128xf32>
    %240 = arith.mulf %149, %218 : vector<8x128xf32>
    %241 = arith.subf %239, %240 : vector<8x128xf32>
    %242 = arith.mulf %149, %226 : vector<8x128xf32>
    %243 = arith.mulf %157, %218 : vector<8x128xf32>
    %244 = arith.addf %242, %243 : vector<8x128xf32>
    %cst_73 = arith.constant 1.000000e+00 : f32
    %245 = vector.broadcast %cst_73 : f32 to vector<8x128xf32>
    %246 = arith.addf %245, %235 : vector<8x128xf32>
    %cst_74 = arith.constant 1.000000e+00 : f32
    %247 = vector.broadcast %cst_74 : f32 to vector<8x128xf32>
    %248 = arith.subf %247, %235 : vector<8x128xf32>
    %249 = arith.addf %241, %229 : vector<8x128xf32>
    %250 = arith.subf %241, %229 : vector<8x128xf32>
    %251 = arith.addf %246, %249 : vector<8x128xf32>
    %252 = arith.addf %248, %250 : vector<8x128xf32>
    %253 = arith.subf %246, %249 : vector<8x128xf32>
    %254 = arith.subf %248, %250 : vector<8x128xf32>
    %255 = arith.addf %244, %232 : vector<8x128xf32>
    %256 = arith.subf %244, %232 : vector<8x128xf32>
    %257 = arith.addf %238, %255 : vector<8x128xf32>
    %258 = arith.subf %256, %238 : vector<8x128xf32>
    %259 = arith.subf %238, %255 : vector<8x128xf32>
    %cst_75 = arith.constant 0.000000e+00 : f32
    %260 = vector.broadcast %cst_75 : f32 to vector<8x128xf32>
    %261 = arith.subf %260, %238 : vector<8x128xf32>
    %262 = arith.subf %261, %256 : vector<8x128xf32>
    %263 = arith.mulf %252, %235 : vector<8x128xf32>
    %264 = arith.mulf %258, %238 : vector<8x128xf32>
    %265 = arith.subf %263, %264 : vector<8x128xf32>
    %266 = arith.mulf %252, %238 : vector<8x128xf32>
    %267 = arith.mulf %258, %235 : vector<8x128xf32>
    %268 = arith.addf %266, %267 : vector<8x128xf32>
    %269 = arith.mulf %253, %241 : vector<8x128xf32>
    %270 = arith.mulf %259, %244 : vector<8x128xf32>
    %271 = arith.subf %269, %270 : vector<8x128xf32>
    %272 = arith.mulf %253, %244 : vector<8x128xf32>
    %273 = arith.mulf %259, %241 : vector<8x128xf32>
    %274 = arith.addf %272, %273 : vector<8x128xf32>
    %275 = arith.mulf %254, %229 : vector<8x128xf32>
    %276 = arith.mulf %262, %232 : vector<8x128xf32>
    %277 = arith.subf %275, %276 : vector<8x128xf32>
    %278 = arith.mulf %254, %232 : vector<8x128xf32>
    %279 = arith.mulf %262, %229 : vector<8x128xf32>
    %280 = arith.addf %278, %279 : vector<8x128xf32>
    %281 = arith.mulf %251, %251 : vector<8x128xf32>
    %282 = arith.mulf %257, %257 : vector<8x128xf32>
    %283 = arith.addf %281, %282 : vector<8x128xf32>
    %284 = vector.broadcast %4 : f32 to vector<8x128xf32>
    %285 = arith.mulf %284, %283 : vector<8x128xf32>
    %286 = arith.mulf %265, %265 : vector<8x128xf32>
    %287 = arith.mulf %268, %268 : vector<8x128xf32>
    %288 = arith.addf %286, %287 : vector<8x128xf32>
    %289 = vector.broadcast %5 : f32 to vector<8x128xf32>
    %290 = arith.mulf %289, %288 : vector<8x128xf32>
    %291 = arith.addf %285, %290 : vector<8x128xf32>
    %292 = arith.mulf %271, %271 : vector<8x128xf32>
    %293 = arith.mulf %274, %274 : vector<8x128xf32>
    %294 = arith.addf %292, %293 : vector<8x128xf32>
    %295 = vector.broadcast %6 : f32 to vector<8x128xf32>
    %296 = arith.mulf %295, %294 : vector<8x128xf32>
    %297 = arith.addf %291, %296 : vector<8x128xf32>
    %298 = arith.mulf %277, %277 : vector<8x128xf32>
    %299 = arith.mulf %280, %280 : vector<8x128xf32>
    %300 = arith.addf %298, %299 : vector<8x128xf32>
    %301 = vector.broadcast %7 : f32 to vector<8x128xf32>
    %302 = arith.mulf %301, %300 : vector<8x128xf32>
    %303 = arith.addf %297, %302 : vector<8x128xf32>
    %304 = arith.mulf %251, %265 : vector<8x128xf32>
    %305 = arith.mulf %257, %268 : vector<8x128xf32>
    %306 = arith.addf %304, %305 : vector<8x128xf32>
    %307 = vector.broadcast %8 : f32 to vector<8x128xf32>
    %308 = arith.mulf %307, %306 : vector<8x128xf32>
    %309 = arith.addf %303, %308 : vector<8x128xf32>
    %310 = arith.mulf %251, %271 : vector<8x128xf32>
    %311 = arith.mulf %257, %274 : vector<8x128xf32>
    %312 = arith.addf %310, %311 : vector<8x128xf32>
    %313 = vector.broadcast %9 : f32 to vector<8x128xf32>
    %314 = arith.mulf %313, %312 : vector<8x128xf32>
    %315 = arith.addf %309, %314 : vector<8x128xf32>
    %316 = arith.mulf %251, %277 : vector<8x128xf32>
    %317 = arith.mulf %257, %280 : vector<8x128xf32>
    %318 = arith.addf %316, %317 : vector<8x128xf32>
    %319 = vector.broadcast %10 : f32 to vector<8x128xf32>
    %320 = arith.mulf %319, %318 : vector<8x128xf32>
    %321 = arith.addf %315, %320 : vector<8x128xf32>
    %322 = arith.mulf %265, %271 : vector<8x128xf32>
    %323 = arith.mulf %268, %274 : vector<8x128xf32>
    %324 = arith.addf %322, %323 : vector<8x128xf32>
    %325 = vector.broadcast %11 : f32 to vector<8x128xf32>
    %326 = arith.mulf %325, %324 : vector<8x128xf32>
    %327 = arith.addf %321, %326 : vector<8x128xf32>
    %328 = arith.mulf %265, %277 : vector<8x128xf32>
    %329 = arith.mulf %268, %280 : vector<8x128xf32>
    %330 = arith.addf %328, %329 : vector<8x128xf32>
    %331 = vector.broadcast %12 : f32 to vector<8x128xf32>
    %332 = arith.mulf %331, %330 : vector<8x128xf32>
    %333 = arith.addf %327, %332 : vector<8x128xf32>
    %334 = arith.mulf %271, %277 : vector<8x128xf32>
    %335 = arith.mulf %274, %280 : vector<8x128xf32>
    %336 = arith.addf %334, %335 : vector<8x128xf32>
    %337 = vector.broadcast %13 : f32 to vector<8x128xf32>
    %338 = arith.mulf %337, %336 : vector<8x128xf32>
    %339 = arith.addf %333, %338 : vector<8x128xf32>
    %340 = arith.index_cast %15 : i32 to index
    %c0_76 = arith.constant 0 : index
    %341 = vector.load %arg3[%340, %c0_76] : memref<8x128xf32, #tpu.memory_space<vmem>>, vector<8x128xf32>
    tpu.vector_store %arg3[%340, %c0_76], %339 {strides = array<i32>} : memref<8x128xf32, #tpu.memory_space<vmem>>, vector<8x128xf32>,
    %c1_i32 = arith.constant 1 : i32
    return
  }
  func.func @transform_0(%arg0: i32) -> i32 {
    %c0_i32 = arith.constant 0 : i32
    %c0_i32_0 = arith.constant 0 : i32
    return %c0_i32 : i32
  }
  func.func @transform_1(%arg0: i32) -> (i32, i32) {
    %c0_i32 = arith.constant 0 : i32
    %c0_i32_0 = arith.constant 0 : i32
    return %arg0, %c0_i32 : i32, i32
  }
  func.func @transform_2(%arg0: i32) -> (i32, i32) {
    %c0_i32 = arith.constant 0 : i32
    %c0_i32_0 = arith.constant 0 : i32
    return %arg0, %c0_i32 : i32, i32
  }
}

</mosaic_0001>

<llo_original>
// kernel: tpu_custom_call.1
$region0: #{tpu_custom_call.1}
  #allocation0 [shape = 'u32[]', space=smem, size = 0x4, offset = 0x4, fixed_abs, tag = 'smem constant byte address 0x4 - core index']
  #allocation1 [shape = 'u32[72,128]{1,0:T(1,128)}', space=vmem, size = 0x9000, scoped, tag = 'internal scratch']
  %s0 = inlined_call_operand.hbm [shape: f32[14], index: 0, kind: input, shape index: {}]
  %s1 = inlined_call_operand.hbm [shape: f32[8,128], index: 1, kind: input, shape index: {}]
  %s2 = inlined_call_operand.hbm [shape: f32[8,128], index: 2, kind: output, shape index: {}]
  %s3 = sld [smem:[#allocation0]]
  $region26: #{tpu_custom_call.1} parent=0
    _
  %s5 = ssub.s32 1, %s3
  %s6 = scalar_select 0, %s5, %s3
  $region1: #{tpu_custom_call.1} parent=0
    #allocation2 [shape = 'u8[512]{0}', space=smem, size = 0x200, scoped, tag = 'input window, operand 0, single buffered']
    #allocation3 [shape = 's32[1]{0}', space=sflag, size = 0x4, scoped, tag = 'scoped memory for tpu_custom_call.1']
    #allocation4 [shape = 's32[1]{0}', space=sflag, size = 0x4, scoped, tag = 'scoped memory for tpu_custom_call.1']
    #allocation5 [shape = 's32[1]{0}', space=sflag, size = 0x4, scoped, tag = 'scoped memory for tpu_custom_call.1']
    #allocation6 [shape = 'u8[4096]{0}', space=vmem, size = 0x1000, scoped, tag = 'input window, operand 1, single buffered']
    #allocation7 [shape = 'u8[4096]{0}', space=vmem, size = 0x1000, scoped, tag = 'output window, operand 0, single buffered']
    %7 = vsyncpa [#allocation5], 0
    %8 = vsyncpa [#allocation3], 0
    %9 = vsyncpa [#allocation4], 0
    // Predicated region
    $region2: #{tpu_custom_call.1} parent=1 // pred_check
      _
    $region3: #{tpu_custom_call.1} parent=1 // pred_check_branch
      %11 = sbr.rel (0) target = $region5
    $region4: #{tpu_custom_call.1} parent=1 // pred_region
      %13 = vsyncadd [#allocation5], 0
      %s15 = sshll.u32 %s0, 4
      %s16 = int_to_ptr.hbm [resolvable:$true] %s15
      %18 = dma.hbm_to_smem %s16, 16, [#allocation2], [#allocation5]
    $region5: #{tpu_custom_call.1} parent=1 // pred_fallthru
      _
    // Predicated region
    $region6: #{tpu_custom_call.1} parent=1 // pred_check
      _
    $region7: #{tpu_custom_call.1} parent=1 // pred_check_branch
      %20 = sbr.rel (0) target = $region9
    $region8: #{tpu_custom_call.1} parent=1 // pred_region
      %22 = vsyncadd [#allocation3], 0
      %s24 = sshll.u32 %s1, 4
      %s25 = int_to_ptr.hbm [resolvable:$true] %s24
      %s26 = sshll.u32 [#allocation6], 4
      %s27 = int_to_ptr.vmem [resolvable:$true] %s26
      %29 = dma.hbm_to_vmem [thread:$0]  %s25, 128, %s27, [#allocation3]
    $region9: #{tpu_custom_call.1} parent=1 // pred_fallthru
      _
    // Predicated region
    $region10: #{tpu_custom_call.1} parent=1 // pred_check
      _
    $region11: #{tpu_custom_call.1} parent=1 // pred_check_branch
      %31 = sbr.rel (0) target = $region13
    $region12: #{tpu_custom_call.1} parent=1 // pred_region
      %33 = dma.done [#allocation5], 16
    $region13: #{tpu_custom_call.1} parent=1 // pred_fallthru
      _
    // Predicated region
    $region14: #{tpu_custom_call.1} parent=1 // pred_check
      _
    $region15: #{tpu_custom_call.1} parent=1 // pred_check_branch
      %35 = sbr.rel (0) target = $region17
    $region16: #{tpu_custom_call.1} parent=1 // pred_region
      %37 = dma.done [#allocation3], 128
    $region17: #{tpu_custom_call.1} parent=1 // pred_fallthru
      _
    %38 = sfence
    %s39 = sld [smem:[#allocation2]]
    %s40 = sld [smem:[#allocation2 + $0x1]]
    %s41 = sld [smem:[#allocation2 + $0x2]]
    %s42 = sld [smem:[#allocation2 + $0x3]]
    %s43 = sld [smem:[#allocation2 + $0x4]]
    %s44 = sld [smem:[#allocation2 + $0x5]]
    %s45 = sld [smem:[#allocation2 + $0x6]]
    %s46 = sld [smem:[#allocation2 + $0x7]]
    %s47 = sld [smem:[#allocation2 + $0x8]]
    %s48 = sld [smem:[#allocation2 + $0x9]]
    %s49 = sld [smem:[#allocation2 + $0xa]]
    %s50 = sld [smem:[#allocation2 + $0xb]]
    %s51 = sld [smem:[#allocation2 + $0xc]]
    %s52 = sld [smem:[#allocation2 + $0xd]]
    %v53 = vld [vmem:[#allocation6] sm:$0xff]
    %v54 = vstv %s39
    %v55 = vmul.f32 %v54, %v53
    %v56 = vstv %s41
    %v57 = vadd.f32 %v55, %v56
    %v58 = vmax.f32 %v57, 0.0
    %v59 = vstv %s40
    %v60 = vmul.f32 %v59, %v53
    %v61 = vstv %s42
    %v62 = vadd.f32 %v60, %v61
    %v63 = vmax.f32 %v62, 0.0
    %v64 = vmul.f32 %v58, 2.0
    %v65 = vmul.f32 %v64, 0.63661975
    %v66 = vadd.f32 %v65, 0.5
    %v67 = vfloor.f32 %v66
    %v68 = vmul.f32 %v67, 1.5707964
    %v69 = vsub.f32 %v64, %v68
    %v70 = vmul.f32 %v67, -4.371139e-08
    %v71 = vsub.f32 %v69, %v70
    %v72 = vmul.f32 %v71, %v71
    %v73 = vmul.f32 %v72, -0.00019515296
    %v74 = vadd.f32 %v73, 0.008332161
    %v75 = vmul.f32 %v72, %v74
    %v76 = vadd.f32 %v75, -0.16666654
    %v77 = vmul.f32 %v72, %v76
    %v78 = vadd.f32 %v77, 1.0
    %v79 = vmul.f32 %v71, %v78
    %v80 = vmul.f32 %v72, 2.4433157e-05
    %v81 = vadd.f32 %v80, -0.0013887316
    %v82 = vmul.f32 %v72, %v81
    %v83 = vadd.f32 %v82, 0.041666646
    %v84 = vmul.f32 %v72, %v83
    %v85 = vadd.f32 %v84, -0.5
    %v86 = vmul.f32 %v72, %v85
    %v87 = vadd.f32 %v86, 1.0
    %v88 = vmul.f32 %v67, 0.25
    %v89 = vfloor.f32 %v88
    %v90 = vmul.f32 %v89, 4.0
    %v91 = vsub.f32 %v67, %v90
    %vm92 = vcmp.eq.f32.partialorder %v91, 1.0
    %vm93 = vcmp.eq.f32.partialorder %v91, 3.0
    %vm94 = vmor %vm92, %vm93
    %v95 = vsel %vm94, %v87, %v79
    %v96 = vsel %vm94, %v79, %v87
    %vm97 = vcmp.ge.f32.partialorder %v91, 2.0
    %v98 = vsub.f32 0.0, %v95
    %v99 = vsel %vm97, %v98, %v95
    %vm100 = vcmp.eq.f32.partialorder %v91, 2.0
    %vm101 = vmor %vm92, %vm100
    %v102 = vsub.f32 0.0, %v96
    %v103 = vsel %vm101, %v102, %v96
    %v104 = vmul.f32 %v63, 2.0
    %v105 = vmul.f32 %v104, 0.63661975
    %v106 = vadd.f32 %v105, 0.5
    %v107 = vfloor.f32 %v106
    %v108 = vmul.f32 %v107, 1.5707964
    %v109 = vsub.f32 %v104, %v108
    %v110 = vmul.f32 %v107, -4.371139e-08
    %v111 = vsub.f32 %v109, %v110
    %v112 = vmul.f32 %v111, %v111
    %v113 = vmul.f32 %v112, -0.00019515296
    %v114 = vadd.f32 %v113, 0.008332161
    %v115 = vmul.f32 %v112, %v114
    %v116 = vadd.f32 %v115, -0.16666654
    %v117 = vmul.f32 %v112, %v116
    %v118 = vadd.f32 %v117, 1.0
    %v119 = vmul.f32 %v111, %v118
    %v120 = vmul.f32 %v112, 2.4433157e-05
    %v121 = vadd.f32 %v120, -0.0013887316
    %v122 = vmul.f32 %v112, %v121
    %v123 = vadd.f32 %v122, 0.041666646
    %v124 = vmul.f32 %v112, %v123
    %v125 = vadd.f32 %v124, -0.5
    %v126 = vmul.f32 %v112, %v125
    %v127 = vadd.f32 %v126, 1.0
    %v128 = vmul.f32 %v107, 0.25
    %v129 = vfloor.f32 %v128
    %v130 = vmul.f32 %v129, 4.0
    %v131 = vsub.f32 %v107, %v130
    %vm132 = vcmp.eq.f32.partialorder %v131, 1.0
    %vm133 = vcmp.eq.f32.partialorder %v131, 3.0
    %vm134 = vmor %vm132, %vm133
    %v135 = vsel %vm134, %v127, %v119
    %v136 = vsel %vm134, %v119, %v127
    %vm137 = vcmp.ge.f32.partialorder %v131, 2.0
    %v138 = vsub.f32 0.0, %v135
    %v139 = vsel %vm137, %v138, %v135
    %vm140 = vcmp.eq.f32.partialorder %v131, 2.0
    %vm141 = vmor %vm132, %vm140
    %v142 = vsub.f32 0.0, %v136
    %v143 = vsel %vm141, %v142, %v136
    %v144 = vsub.f32 3.1415927, %v58
    %v145 = vmul.f32 %v144, 2.0
    %v146 = vsub.f32 3.1415927, %v63
    %v147 = vmul.f32 %v145, %v146
    %v148 = vmul.f32 %v147, 0.63661975
    %v149 = vadd.f32 %v148, 0.5
    %v150 = vfloor.f32 %v149
    %v151 = vmul.f32 %v150, 1.5707964
    %v152 = vsub.f32 %v147, %v151
    %v153 = vmul.f32 %v150, -4.371139e-08
    %v154 = vsub.f32 %v152, %v153
    %v155 = vmul.f32 %v154, %v154
    %v156 = vmul.f32 %v155, -0.00019515296
    %v157 = vadd.f32 %v156, 0.008332161
    %v158 = vmul.f32 %v155, %v157
    %v159 = vadd.f32 %v158, -0.16666654
    %v160 = vmul.f32 %v155, %v159
    %v161 = vadd.f32 %v160, 1.0
    %v162 = vmul.f32 %v154, %v161
    %v163 = vmul.f32 %v155, 2.4433157e-05
    %v164 = vadd.f32 %v163, -0.0013887316
    %v165 = vmul.f32 %v155, %v164
    %v166 = vadd.f32 %v165, 0.041666646
    %v167 = vmul.f32 %v155, %v166
    %v168 = vadd.f32 %v167, -0.5
    %v169 = vmul.f32 %v155, %v168
    %v170 = vadd.f32 %v169, 1.0
    %v171 = vmul.f32 %v150, 0.25
    %v172 = vfloor.f32 %v171
    %v173 = vmul.f32 %v172, 4.0
    %v174 = vsub.f32 %v150, %v173
    %vm175 = vcmp.eq.f32.partialorder %v174, 1.0
    %vm176 = vcmp.eq.f32.partialorder %v174, 3.0
    %vm177 = vmor %vm175, %vm176
    %v178 = vsel %vm177, %v170, %v162
    %v179 = vsel %vm177, %v162, %v170
    %vm180 = vcmp.ge.f32.partialorder %v174, 2.0
    %v181 = vsub.f32 0.0, %v178
    %v182 = vsel %vm180, %v181, %v178
    %vm183 = vcmp.eq.f32.partialorder %v174, 2.0
    %vm184 = vmor %vm175, %vm183
    %v185 = vsub.f32 0.0, %v179
    %v186 = vsel %vm184, %v185, %v179
    %v187 = vmul.f32 %v103, %v143
    %v188 = vmul.f32 %v99, %v139
    %v189 = vsub.f32 %v187, %v188
    %v190 = vmul.f32 %v99, %v143
    %v191 = vmul.f32 %v103, %v139
    %v192 = vadd.f32 %v190, %v191
    %v193 = vmul.f32 %v103, %v186
    %v194 = vmul.f32 %v99, %v182
    %v195 = vsub.f32 %v193, %v194
    %v196 = vmul.f32 %v99, %v186
    %v197 = vmul.f32 %v103, %v182
    %v198 = vadd.f32 %v196, %v197
    %v199 = vmul.f32 %v143, %v186
    %v200 = vmul.f32 %v139, %v182
    %v201 = vsub.f32 %v199, %v200
    %v202 = vmul.f32 %v139, %v186
    %v203 = vmul.f32 %v143, %v182
    %v204 = vadd.f32 %v202, %v203
    %v205 = vadd.f32 %v195, 1.0
    %v206 = vsub.f32 1.0, %v195
    %v207 = vadd.f32 %v201, %v189
    %v208 = vsub.f32 %v201, %v189
    %v209 = vadd.f32 %v205, %v207
    %v210 = vadd.f32 %v206, %v208
    %v211 = vsub.f32 %v205, %v207
    %v212 = vsub.f32 %v206, %v208
    %v213 = vadd.f32 %v204, %v192
    %v214 = vsub.f32 %v204, %v192
    %v215 = vadd.f32 %v198, %v213
    %v216 = vsub.f32 %v214, %v198
    %v217 = vsub.f32 %v198, %v213
    %v218 = vsub.f32 0.0, %v198
    %v219 = vsub.f32 %v218, %v214
    %v220 = vmul.f32 %v210, %v195
    %v221 = vmul.f32 %v216, %v198
    %v222 = vsub.f32 %v220, %v221
    %v223 = vmul.f32 %v210, %v198
    %v224 = vmul.f32 %v216, %v195
    %v225 = vadd.f32 %v223, %v224
    %v226 = vmul.f32 %v211, %v201
    %v227 = vmul.f32 %v217, %v204
    %v228 = vsub.f32 %v226, %v227
    %v229 = vmul.f32 %v211, %v204
    %v230 = vmul.f32 %v217, %v201
    %v231 = vadd.f32 %v229, %v230
    %v232 = vmul.f32 %v212, %v189
    %v233 = vmul.f32 %v219, %v192
    %v234 = vsub.f32 %v232, %v233
    %v235 = vmul.f32 %v212, %v192
    %v236 = vmul.f32 %v219, %v189
    %v237 = vadd.f32 %v235, %v236
    %v238 = vmul.f32 %v209, %v209
    %v239 = vmul.f32 %v215, %v215
    %v240 = vadd.f32 %v238, %v239
    %v241 = vstv %s43
    %v242 = vmul.f32 %v241, %v240
    %v243 = vmul.f32 %v222, %v222
    %v244 = vmul.f32 %v225, %v225
    %v245 = vadd.f32 %v243, %v244
    %v246 = vstv %s44
    %v247 = vmul.f32 %v246, %v245
    %v248 = vadd.f32 %v242, %v247
    %v249 = vmul.f32 %v228, %v228
    %v250 = vmul.f32 %v231, %v231
    %v251 = vadd.f32 %v249, %v250
    %v252 = vstv %s45
    %v253 = vmul.f32 %v252, %v251
    %v254 = vadd.f32 %v248, %v253
    %v255 = vmul.f32 %v234, %v234
    %v256 = vmul.f32 %v237, %v237
    %v257 = vadd.f32 %v255, %v256
    %v258 = vstv %s46
    %v259 = vmul.f32 %v258, %v257
    %v260 = vadd.f32 %v254, %v259
    %v261 = vmul.f32 %v209, %v222
    %v262 = vmul.f32 %v215, %v225
    %v263 = vadd.f32 %v261, %v262
    %v264 = vstv %s47
    %v265 = vmul.f32 %v264, %v263
    %v266 = vadd.f32 %v260, %v265
    %v267 = vmul.f32 %v209, %v228
    %v268 = vmul.f32 %v215, %v231
    %v269 = vadd.f32 %v267, %v268
    %v270 = vstv %s48
    %v271 = vmul.f32 %v270, %v269
    %v272 = vadd.f32 %v266, %v271
    %v273 = vmul.f32 %v209, %v234
    %v274 = vmul.f32 %v215, %v237
    %v275 = vadd.f32 %v273, %v274
    %v276 = vstv %s49
    %v277 = vmul.f32 %v276, %v275
    %v278 = vadd.f32 %v272, %v277
    %v279 = vmul.f32 %v222, %v228
    %v280 = vmul.f32 %v225, %v231
    %v281 = vadd.f32 %v279, %v280
    %v282 = vstv %s50
    %v283 = vmul.f32 %v282, %v281
    %v284 = vadd.f32 %v278, %v283
    %v285 = vmul.f32 %v222, %v234
    %v286 = vmul.f32 %v225, %v237
    %v287 = vadd.f32 %v285, %v286
    %v288 = vstv %s51
    %v289 = vmul.f32 %v288, %v287
    %v290 = vadd.f32 %v284, %v289
    %v291 = vmul.f32 %v228, %v234
    %v292 = vmul.f32 %v231, %v237
    %v293 = vadd.f32 %v291, %v292
    %v294 = vstv %s52
    %v295 = vmul.f32 %v294, %v293
    %v296 = vadd.f32 %v290, %v295
    %297 = vst [vmem:[#allocation7] sm:$0xff] %v296
    // Predicated region
    $region18: #{tpu_custom_call.1} parent=1 // pred_check
      _
    $region19: #{tpu_custom_call.1} parent=1 // pred_check_branch
      %299 = sbr.rel (0) target = $region21
    $region20: #{tpu_custom_call.1} parent=1 // pred_region
      %301 = vsyncadd [#allocation4], 0
      %s303 = sshll.u32 [#allocation7], 4
      %s304 = int_to_ptr.vmem [resolvable:$true] %s303
      %s305 = sshll.u32 %s2, 4
      %s306 = int_to_ptr.hbm [resolvable:$true] %s305
      %308 = dma.vmem_to_hbm [thread:$0]  %s304, 128, %s306, [#allocation4]
    $region21: #{tpu_custom_call.1} parent=1 // pred_fallthru
      _
    // Predicated region
    $region22: #{tpu_custom_call.1} parent=1 // pred_check
      _
    $region23: #{tpu_custom_call.1} parent=1 // pred_check_branch
      %310 = sbr.rel (0) target = $region25
    $region24: #{tpu_custom_call.1} parent=1 // pred_region
      %312 = dma.done [#allocation4], 128
    $region25: #{tpu_custom_call.1} parent=1 // pred_fallthru
      _
    %313 = vsyncpa [#allocation3], 1
    %314 = vsyncpa [#allocation4], 1
    %315 = vsyncpa [#allocation5], 1

</llo_original>
